<compile_context>
chip_gen: v7x
topology: tpu7x:2x2x1
jax: 0.10.0
libtpu: 0.0.40
codegen_flags: <defaults>
</compile_context>

<pallas_src>
import functools

import jax
import jax.numpy as jnp
from jax.experimental import pallas as pl
from jax.experimental.pallas import tpu as pltpu

_LENGTHSCALE = 0.1  # SetConv lengthscale (train_lengthscale=False -> fixed deterministic init)
_EPS = 1e-8


def _setconv_kernel(xgT_ref, xc_ref, ycT_ref, out_ref, acc_ref, *,
                    lengthscale, x_dim, eps, weight_dtype):
    """One (grid-tile i, context-tile k) step of the SetConv in transposed layout.

    xgT_ref : (x_dim, TP)        grid points (lane axis = grid points)
    xc_ref  : (NC_T, x_dim)      context x tile (padded rows = 1e9 -> weight underflows to 0)
    ycT_ref : (1+y_dim, NC_T)    [ones | y_c]^T  (padded cols = 0)
    out_ref : (1+y_dim, TP)      [density ; normalised signal], written at the last k step
    acc_ref : (1+y_dim, TP) f32  running un-normalised sums across context tiles
    """
    k = pl.program_id(1)

    @pl.when(k == 0)
    def _():
        acc_ref[...] = jnp.zeros_like(acc_ref)

    # Squared pairwise distances: context on sublanes, grid points on lanes.
    if x_dim == 1:
        # (NC_T,1) - (1,TP) -> (NC_T,TP); x_grid row is a cheap sublane broadcast.
        diff = xc_ref[...] - xgT_ref[...]
        d2 = diff * diff
    else:
        # ||a||^2 + ||b||^2 - 2 a.b^T : the cross term rides the (otherwise idle) MXU.
        xc = xc_ref[...]
        xg = xgT_ref[...]
        d2 = (jnp.sum(xc * xc, axis=-1, keepdims=True)
              + jnp.sum(xg * xg, axis=0, keepdims=True)
              - 2.0 * jnp.dot(xc, xg, preferred_element_type=jnp.float32))

    expo = d2 * (-0.5 / (lengthscale * lengthscale))
    # Padded context rows sit at 1e9 -> expo ~ -5e19 -> exp underflows to exactly 0.
    w = jnp.exp(expo.astype(weight_dtype))                         # (NC_T, TP)

    # Fused density + signal: the leading ones row of ycT makes output row 0 the density.
    acc_ref[...] += jnp.dot(ycT_ref[...].astype(weight_dtype), w,
                            preferred_element_type=jnp.float32)    # (1+y_dim, TP)

    @pl.when(k == pl.num_programs(1) - 1)
    def _():
        dens = acc_ref[0:1, :]
        # Two direct slab stores — no concatenate, lane-dense unmasked vst.
        out_ref[0:1, :] = dens
        out_ref[1:, :] = acc_ref[1:, :] * pl.reciprocal(dens + eps, approx=True)


def conv_cnp_encoder(x_c, y_c, x_t, *, embedded_dim, granularity,
                     lengthscale=_LENGTHSCALE, tile_points=512,
                     max_context_tile=1024, bounds=None,
                     weight_dtype=jnp.float32):
    """ConvCNPEncoder.forward.  Returns (F_c, x_grid) with F_c: (embedded_dim, num_points)."""
    x_c = jnp.asarray(x_c, jnp.float32)
    y_c = jnp.asarray(y_c, jnp.float32)
    x_t = jnp.asarray(x_t, jnp.float32)

    assert x_c.ndim == 2 and y_c.ndim == 2 and x_t.ndim == 2
    assert x_c.shape[0] == y_c.shape[0]
    n_c, x_dim = x_c.shape
    y_dim = y_c.shape[1]
    assert x_t.shape[1] == x_dim
    assert embedded_dim == y_dim + 1, "SetConv emits density + y channels"

    # --- grid construction ---------------------------------------------------------
    # num_points is data-dependent in the reference module, so its value must reach the
    # host (static kernel shapes).  We fuse min+max into ONE device->host sync; callers
    # who know the range can pass `bounds=(raw_min, raw_max)` and skip the sync entirely.
    if bounds is None:
        b = jnp.stack([jnp.minimum(jnp.min(x_c), jnp.min(x_t)) - 0.1,
                       jnp.maximum(jnp.max(x_c), jnp.max(x_t)) + 0.1])
        x_min, x_max = (float(v) for v in jax.device_get(b))
    else:
        x_min, x_max = float(bounds[0]) - 0.1, float(bounds[1]) + 0.1
    num_points = int((x_max - x_min) * granularity)
    assert num_points >= 1
    x_grid = jnp.linspace(x_min, x_max, num_points, dtype=jnp.float32)[:, None]  # (P, x_dim)

    # --- tiling ---------------------------------------------------------------------
    nc_tile = min(pl.cdiv(max(n_c, 1), 128) * 128, int(max_context_tile))
    nc_pad = pl.cdiv(max(n_c, 1), nc_tile) * nc_tile

    tile = max(128, min(int(tile_points), 1024)) // 128 * 128
    # Cap so the (nc_tile x tile) weight slab stays <= ~8 MiB (v7x has 64 MiB VMEM/TC).
    tile = min(tile, max(128, (8 * 2**20 // (4 * nc_tile)) // 128 * 128))
    # Keep >= 2 point-tiles when possible so the 'parallel' axis can be sharded across
    # v7x's two TensorCores (and still pipeline within each core).
    while tile > 128 and pl.cdiv(num_points, tile) < 2:
        tile = max(128, (tile // 2) // 128 * 128)
    p_pad = pl.cdiv(num_points, tile) * tile

    # --- padded operands in the transposed, lane-dense layout ------------------------
    xgT = jnp.pad(x_grid.T, ((0, 0), (0, p_pad - num_points)))                # (x_dim, P_pad)
    xc_pad = jnp.pad(x_c, ((0, nc_pad - n_c), (0, 0)), constant_values=1e9)   # (NC_pad, x_dim)
    yc_aug = jnp.concatenate([jnp.ones((n_c, 1), jnp.float32), y_c], axis=-1)
    ycT = jnp.pad(yc_aug, ((0, nc_pad - n_c), (0, 0))).T                      # (1+y_dim, NC_pad)

    kernel = functools.partial(_setconv_kernel, lengthscale=float(lengthscale),
                               x_dim=x_dim, eps=_EPS, weight_dtype=weight_dtype)

    pairs = p_pad * nc_pad
    cost = pl.CostEstimate(
        flops=int(pairs * (2 * (1 + y_dim) + 3 * x_dim + 2)),
        transcendentals=int(pairs),
        bytes_accessed=int(4 * (x_dim * p_pad + nc_pad * (x_dim + 1 + y_dim)
                                + (1 + y_dim) * p_pad)),
    )

    # Explicit VMEM budget: double-buffered inputs + double-buffered output + accumulator
    # + the w/d2 intermediates, with 2x headroom (capped well under v7x's 64 MiB).
    vmem_bytes = 4 * (2 * (tile * x_dim + nc_tile * x_dim + (1 + y_dim) * nc_tile)
                      + 3 * (1 + y_dim) * tile
                      + 2 * nc_tile * tile)
    vmem_limit = int(min(max(2 * vmem_bytes, 16 * 2**20), 48 * 2**20))

    out = pl.pallas_call(
        kernel,
        out_shape=jax.ShapeDtypeStruct((1 + y_dim, p_pad), jnp.float32),
        grid_spec=pltpu.PrefetchScalarGridSpec(
            num_scalar_prefetch=0,
            grid=(p_pad // tile, nc_pad // nc_tile),              # (point tiles, context tiles)
            in_specs=[
                pl.BlockSpec((x_dim, tile), lambda i, k: (0, i)),       # grid points (lanes)
                pl.BlockSpec((nc_tile, x_dim), lambda i, k: (k, 0)),    # context x tile
                pl.BlockSpec((1 + y_dim, nc_tile), lambda i, k: (0, k)),  # [ones | y_c]^T tile
            ],
            out_specs=pl.BlockSpec((1 + y_dim, tile), lambda i, k: (0, i)),
            scratch_shapes=[pltpu.VMEM((1 + y_dim, tile), jnp.float32)],
        ),
        compiler_params=pltpu.CompilerParams(
            dimension_semantics=("parallel", "arbitrary"),
            vmem_limit_bytes=vmem_limit,
        ),
        cost_estimate=cost,
    )(xgT, xc_pad, ycT)

    F_c = out[:, :num_points]   # (embedded_dim, num_points) — already transposed, no XLA transpose
    return F_c, x_grid


def _reference(x_c, y_c, x_grid, lengthscale=_LENGTHSCALE):
    d2 = jnp.sum((x_grid[:, None, :] - x_c[None, :, :]) ** 2, axis=-1)
    w = jnp.exp(-0.5 * d2 / (lengthscale * lengthscale))
    dens = jnp.sum(w, axis=-1, keepdims=True)
    sig = (w @ y_c) / (dens + _EPS)
    return jnp.concatenate([dens, sig], axis=-1).T


if __name__ == "__main__":
    key = jax.random.PRNGKey(0)
    k1, k2, k3 = jax.random.split(key, 3)

    x_dim, y_dim = 1, 1
    embedded_dim = y_dim + 1      # density channel + data channel
    granularity = 16
    n_ctx, n_tgt = 10, 8

    x_c = jax.random.uniform(k1, (n_ctx, x_dim), minval=-2.0, maxval=2.0, dtype=jnp.float32)
    y_c = jax.random.normal(k2, (n_ctx, y_dim), dtype=jnp.float32)
    x_t = jax.random.uniform(k3, (n_tgt, x_dim), minval=-2.0, maxval=2.0, dtype=jnp.float32)

    # NOTE: on v6e/v7x pass weight_dtype=jnp.bfloat16 for ~2x exp/VPU throughput; kept f32
    # here (and always on v5e) so the numerical self-test stays tight and deterministic.
    F_c, x_grid = conv_cnp_encoder(
        x_c, y_c, x_t, embedded_dim=embedded_dim, granularity=granularity
    )
    F_c, x_grid = jax.block_until_ready((F_c, x_grid))

    # shape contract from the PyTorch forward
    assert F_c.shape[0] == embedded_dim
    assert F_c.shape[1] == x_grid.shape[0]
    assert x_grid.shape[1] == x_dim

    ref = _reference(x_c, y_c, x_grid)
    # Density channel carries no approximate ops -> tight tolerance.
    assert jnp.allclose(F_c[0], ref[0], atol=1e-4, rtol=1e-5), \
        float(jnp.max(jnp.abs(F_c[0] - ref[0])))
    # Signal channels go through pl.reciprocal(approx=True) (EUP vrcp) -> slightly looser.
    assert jnp.allclose(F_c, ref, atol=5e-3, rtol=5e-3), \
        float(jnp.max(jnp.abs(F_c - ref)))

    print("KERNEL_OK")
</pallas_src>

<mosaic_0001>
module attributes {stable_mosaic.version = 11 : i64} {
  func.func @_setconv_kernel(%arg0: i32, %arg1: i32, %arg2: memref<1x128xf32, #tpu.memory_space<vmem>>, %arg3: memref<128x1xf32, #tpu.memory_space<vmem>>, %arg4: memref<2x128xf32, #tpu.memory_space<vmem>>, %arg5: memref<2x128xf32, #tpu.memory_space<vmem>>, %arg6: memref<2x128xf32, #tpu.memory_space<vmem>>) attributes {dimension_semantics = [#tpu.dimension_semantics<parallel>, #tpu.dimension_semantics<arbitrary>], iteration_bounds = array<i64: 1, 1>, scalar_prefetch = 0 : i64, scratch_operands = 1 : i64, tpu.core_type = #tpu.core_type<tc>, window_params = [{transform_indices = @transform_0, window_bounds = array<i64: 1, 128>}, {transform_indices = @transform_1, window_bounds = array<i64: 128, 1>}, {transform_indices = @transform_2, window_bounds = array<i64: 2, 128>}, {transform_indices = @transform_3, window_bounds = array<i64: 2, 128>}]} {
    %c0_i32 = arith.constant 0 : i32
    %0 = arith.cmpi eq, %arg1, %c0_i32 : i32
    %1 = arith.extui %0 : i1 to i32
    %c0_i32_0 = arith.constant 0 : i32
    %2 = arith.cmpi ne, %1, %c0_i32_0 : i32
    scf.if %2 {
      %cst_13 = arith.constant 0.000000e+00 : f32
      %20 = vector.broadcast %cst_13 : f32 to vector<2x128xf32>
      %c0_14 = arith.constant 0 : index
      %c0_15 = arith.constant 0 : index
      %21 = vector.load %arg6[%c0_14, %c0_15] : memref<2x128xf32, #tpu.memory_space<vmem>>, vector<2x128xf32>
      tpu.vector_store %arg6[%c0_14, %c0_15], %20 {strides = array<i32>} : memref<2x128xf32, #tpu.memory_space<vmem>>, vector<2x128xf32>,
    } else {
    }
    %c0 = arith.constant 0 : index
    %c0_1 = arith.constant 0 : index
    %3 = vector.load %arg3[%c0, %c0_1] : memref<128x1xf32, #tpu.memory_space<vmem>>, vector<128x1xf32>
    %c0_2 = arith.constant 0 : index
    %c0_3 = arith.constant 0 : index
    %4 = vector.load %arg2[%c0_2, %c0_3] : memref<1x128xf32, #tpu.memory_space<vmem>>, vector<1x128xf32>
    %5 = vector.broadcast %3 : vector<128x1xf32> to vector<128x128xf32>
    %6 = vector.broadcast %4 : vector<1x128xf32> to vector<128x128xf32>
    %7 = arith.subf %5, %6 : vector<128x128xf32>
    %8 = arith.mulf %7, %7 : vector<128x128xf32>
    %cst = arith.constant -5.000000e+01 : f32
    %9 = vector.broadcast %cst : f32 to vector<128x128xf32>
    %10 = arith.mulf %8, %9 : vector<128x128xf32>
    %11 = math.exp %10 : vector<128x128xf32>
    %c0_4 = arith.constant 0 : index
    %c0_5 = arith.constant 0 : index
    %12 = vector.load %arg6[%c0_4, %c0_5] : memref<2x128xf32, #tpu.memory_space<vmem>>, vector<2x128xf32>
    %c0_6 = arith.constant 0 : index
    %c0_7 = arith.constant 0 : index
    %13 = vector.load %arg4[%c0_6, %c0_7] : memref<2x128xf32, #tpu.memory_space<vmem>>, vector<2x128xf32>
    %cst_8 = arith.constant dense<0.000000e+00> : vector<2x128xf32>
    %14 = tpu.matmul %13, %11, %cst_8 {dimension_numbers = #tpu.dot_dimension_numbers<[1], [0], [0], [1], [0, 0, 1, 1], [], []>} : vector<2x128xf32>, vector<128x128xf32>, vector<2x128xf32> -> vector<2x128xf32>
    %15 = arith.addf %12, %14 : vector<2x128xf32>
    %c0_9 = arith.constant 0 : index
    %c0_10 = arith.constant 0 : index
    %16 = vector.load %arg6[%c0_9, %c0_10] : memref<2x128xf32, #tpu.memory_space<vmem>>, vector<2x128xf32>
    tpu.vector_store %arg6[%c0_9, %c0_10], %15 {strides = array<i32>} : memref<2x128xf32, #tpu.memory_space<vmem>>, vector<2x128xf32>,
    %c0_i32_11 = arith.constant 0 : i32
    %17 = arith.cmpi eq, %arg1, %c0_i32_11 : i32
    %18 = arith.extui %17 : i1 to i32
    %c0_i32_12 = arith.constant 0 : i32
    %19 = arith.cmpi ne, %18, %c0_i32_12 : i32
    scf.if %19 {
      %c0_13 = arith.constant 0 : index
      %c0_14 = arith.constant 0 : index
      %20 = vector.load %arg6[%c0_13, %c0_14] : memref<2x128xf32, #tpu.memory_space<vmem>>, vector<1x128xf32>
      %c0_15 = arith.constant 0 : index
      %c0_16 = arith.constant 0 : index
      %21 = vector.load %arg5[%c0_15, %c0_16] : memref<2x128xf32, #tpu.memory_space<vmem>>, vector<1x128xf32>
      tpu.vector_store %arg5[%c0_15, %c0_16], %20 {strides = array<i32>} : memref<2x128xf32, #tpu.memory_space<vmem>>, vector<1x128xf32>,
      %c1 = arith.constant 1 : index
      %c0_17 = arith.constant 0 : index
      %22 = vector.load %arg6[%c1, %c0_17] : memref<2x128xf32, #tpu.memory_space<vmem>>, vector<1x128xf32>
      %cst_18 = arith.constant 9.99999993E-9 : f32
      %23 = vector.broadcast %cst_18 : f32 to vector<1x128xf32>
      %24 = arith.addf %20, %23 : vector<1x128xf32>
      %25 = tpu.reciprocal %24 {approx = true} : vector<1x128xf32> -> vector<1x128xf32>
      %26 = arith.mulf %22, %25 : vector<1x128xf32>
      %c1_19 = arith.constant 1 : index
      %c0_20 = arith.constant 0 : index
      %27 = vector.load %arg5[%c1_19, %c0_20] : memref<2x128xf32, #tpu.memory_space<vmem>>, vector<1x128xf32>
      tpu.vector_store %arg5[%c1_19, %c0_20], %26 {strides = array<i32>} : memref<2x128xf32, #tpu.memory_space<vmem>>, vector<1x128xf32>,
    } else {
    }
    return
  }
  func.func @transform_0(%arg0: i32, %arg1: i32) -> (i32, i32) {
    %c0_i32 = arith.constant 0 : i32
    %c0_i32_0 = arith.constant 0 : i32
    return %c0_i32, %arg0 : i32, i32
  }
  func.func @transform_1(%arg0: i32, %arg1: i32) -> (i32, i32) {
    %c0_i32 = arith.constant 0 : i32
    %c0_i32_0 = arith.constant 0 : i32
    return %arg1, %c0_i32 : i32, i32
  }
  func.func @transform_2(%arg0: i32, %arg1: i32) -> (i32, i32) {
    %c0_i32 = arith.constant 0 : i32
    %c0_i32_0 = arith.constant 0 : i32
    return %c0_i32, %arg1 : i32, i32
  }
  func.func @transform_3(%arg0: i32, %arg1: i32) -> (i32, i32) {
    %c0_i32 = arith.constant 0 : i32
    %c0_i32_0 = arith.constant 0 : i32
    return %c0_i32, %arg0 : i32, i32
  }
}

</mosaic_0001>

<llo_original>
// kernel: tpu_custom_call.1
$region0: #{tpu_custom_call.1}
  #allocation0 [shape = 'u32[]', space=smem, size = 0x4, offset = 0x4, fixed_abs, tag = 'smem constant byte address 0x4 - core index']
  #allocation1 [shape = 'u32[144,128]{1,0:T(1,128)}', space=vmem, size = 0x12000, scoped, tag = 'internal scratch']
  #allocation2 [shape = 'f32[2,128]{1,0:T(2,128)}', space=vmem, size = 0x400, scoped, tag = 'scratch operand']
  %s0 = inlined_call_operand.vmem [shape: f32[1,128], index: 0, kind: input, shape index: {}]
  %s1 = inlined_call_operand.vmem [shape: f32[128,1], index: 1, kind: input, shape index: {}]
  %s2 = inlined_call_operand.vmem [shape: f32[2,128], index: 2, kind: input, shape index: {}]
  %s3 = inlined_call_operand.hbm [shape: f32[2,128], index: 3, kind: output, shape index: {}]
  %s4 = sld [smem:[#allocation0]]
  $region30: #{tpu_custom_call.1} parent=0
    _
  %s6 = ssub.s32 1, %s4
  %s7 = scalar_select 0, %s6, %s4
  $region1: #{tpu_custom_call.1} parent=0
    #allocation3 [shape = 'u8[1024]{0}', space=vmem, size = 0x400, scoped, tag = 'output window, operand 0, single buffered']
    #allocation4 [shape = 's32[1]{0}', space=sflag, size = 0x4, scoped, tag = 'scoped memory for tpu_custom_call.1']
    %8 = vsyncpa [#allocation4], 0
    // Predicated region
    $region2: #{tpu_custom_call.1} parent=1 // pred_check
      _
    $region3: #{tpu_custom_call.1} parent=1 // pred_check_branch
      %10 = sbr.rel (0) target = $region5
    $region4: #{tpu_custom_call.1} parent=1 // pred_region
      _
    $region5: #{tpu_custom_call.1} parent=1 // pred_fallthru
      _
    // Predicated region
    $region6: #{tpu_custom_call.1} parent=1 // pred_check
      _
    $region7: #{tpu_custom_call.1} parent=1 // pred_check_branch
      %12 = sbr.rel (0) target = $region9
    $region8: #{tpu_custom_call.1} parent=1 // pred_region
      _
    $region9: #{tpu_custom_call.1} parent=1 // pred_fallthru
      _
    // Predicated region
    $region10: #{tpu_custom_call.1} parent=1 // pred_check
      _
    $region11: #{tpu_custom_call.1} parent=1 // pred_check_branch
      %14 = sbr.rel (0) target = $region13
    $region12: #{tpu_custom_call.1} parent=1 // pred_region
      _
    $region13: #{tpu_custom_call.1} parent=1 // pred_fallthru
      _
    %p15 = scmp.eq.s32.totalorder 0, 0
    // Predicated region
    $region14: #{tpu_custom_call.1} parent=1 // pred_check
      %p16 = pneg %p15
    $region15: #{tpu_custom_call.1} parent=1 // pred_check_branch
      %18 = sbr.rel (%p16) target = $region17
    $region16: #{tpu_custom_call.1} parent=1 // pred_region
      %19 = vst [vmem:[#allocation2] sm:$0x3] 0.0
    $region17: #{tpu_custom_call.1} parent=1 // pred_fallthru
      _
    %v20 = vld [vmem:[%s1] sm:$0xff]
    %v21 = vld [vmem:[%s1 + $0x8] sm:$0xff]
    %v22 = vld [vmem:[%s1 + $0x10] sm:$0xff]
    %v23 = vld [vmem:[%s1 + $0x18] sm:$0xff]
    %v24 = vld [vmem:[%s1 + $0x20] sm:$0xff]
    %v25 = vld [vmem:[%s1 + $0x28] sm:$0xff]
    %v26 = vld [vmem:[%s1 + $0x30] sm:$0xff]
    %v27 = vld [vmem:[%s1 + $0x38] sm:$0xff]
    %v28 = vld [vmem:[%s1 + $0x40] sm:$0xff]
    %v29 = vld [vmem:[%s1 + $0x48] sm:$0xff]
    %v30 = vld [vmem:[%s1 + $0x50] sm:$0xff]
    %v31 = vld [vmem:[%s1 + $0x58] sm:$0xff]
    %v32 = vld [vmem:[%s1 + $0x60] sm:$0xff]
    %v33 = vld [vmem:[%s1 + $0x68] sm:$0xff]
    %v34 = vld [vmem:[%s1 + $0x70] sm:$0xff]
    %v35 = vld [vmem:[%s1 + $0x78] sm:$0xff]
    %v36 = vld [vmem:[%s0] sm:$0x1]
    %38 = vset.pattern.permute.xlu0 0
    %39 = vperm.xlu0 %38, %v20
    %v40 = vpop.permute.xlu0 %39
    %43 = vset.pattern.permute.xlu0 0
    %44 = vperm.xlu0 %43, %v21
    %v45 = vpop.permute.xlu0 %44
    %48 = vset.pattern.permute.xlu0 0
    %49 = vperm.xlu0 %48, %v22
    %v50 = vpop.permute.xlu0 %49
    %53 = vset.pattern.permute.xlu0 0
    %54 = vperm.xlu0 %53, %v23
    %v55 = vpop.permute.xlu0 %54
    %58 = vset.pattern.permute.xlu0 0
    %59 = vperm.xlu0 %58, %v24
    %v60 = vpop.permute.xlu0 %59
    %63 = vset.pattern.permute.xlu0 0
    %64 = vperm.xlu0 %63, %v25
    %v65 = vpop.permute.xlu0 %64
    %68 = vset.pattern.permute.xlu0 0
    %69 = vperm.xlu0 %68, %v26
    %v70 = vpop.permute.xlu0 %69
    %73 = vset.pattern.permute.xlu0 0
    %74 = vperm.xlu0 %73, %v27
    %v75 = vpop.permute.xlu0 %74
    %78 = vset.pattern.permute.xlu0 0
    %79 = vperm.xlu0 %78, %v28
    %v80 = vpop.permute.xlu0 %79
    %83 = vset.pattern.permute.xlu0 0
    %84 = vperm.xlu0 %83, %v29
    %v85 = vpop.permute.xlu0 %84
    %88 = vset.pattern.permute.xlu0 0
    %89 = vperm.xlu0 %88, %v30
    %v90 = vpop.permute.xlu0 %89
    %93 = vset.pattern.permute.xlu0 0
    %94 = vperm.xlu0 %93, %v31
    %v95 = vpop.permute.xlu0 %94
    %98 = vset.pattern.permute.xlu0 0
    %99 = vperm.xlu0 %98, %v32
    %v100 = vpop.permute.xlu0 %99
    %103 = vset.pattern.permute.xlu0 0
    %104 = vperm.xlu0 %103, %v33
    %v105 = vpop.permute.xlu0 %104
    %108 = vset.pattern.permute.xlu0 0
    %109 = vperm.xlu0 %108, %v34
    %v110 = vpop.permute.xlu0 %109
    %113 = vset.pattern.permute.xlu0 0
    %114 = vperm.xlu0 %113, %v35
    %v115 = vpop.permute.xlu0 %114
    %v118 = vlaneseq
    %v119 = vshrl.u32 %v118, 7
    %v120 = vsub.s32 0, %v119
    %v121 = vrot.slane %v36, %v120
    %v123 = vsub.f32 %v40, %v121
    %v124 = vsub.f32 %v45, %v121
    %v125 = vsub.f32 %v50, %v121
    %v126 = vsub.f32 %v55, %v121
    %v127 = vsub.f32 %v60, %v121
    %v128 = vsub.f32 %v65, %v121
    %v129 = vsub.f32 %v70, %v121
    %v130 = vsub.f32 %v75, %v121
    %v131 = vsub.f32 %v80, %v121
    %v132 = vsub.f32 %v85, %v121
    %v133 = vsub.f32 %v90, %v121
    %v134 = vsub.f32 %v95, %v121
    %v135 = vsub.f32 %v100, %v121
    %v136 = vsub.f32 %v105, %v121
    %v137 = vsub.f32 %v110, %v121
    %v138 = vsub.f32 %v115, %v121
    %v139 = vmul.f32 %v123, %v123
    %v140 = vmul.f32 %v124, %v124
    %v141 = vmul.f32 %v125, %v125
    %v142 = vmul.f32 %v126, %v126
    %v143 = vmul.f32 %v127, %v127
    %v144 = vmul.f32 %v128, %v128
    %v145 = vmul.f32 %v129, %v129
    %v146 = vmul.f32 %v130, %v130
    %v147 = vmul.f32 %v131, %v131
    %v148 = vmul.f32 %v132, %v132
    %v149 = vmul.f32 %v133, %v133
    %v150 = vmul.f32 %v134, %v134
    %v151 = vmul.f32 %v135, %v135
    %v152 = vmul.f32 %v136, %v136
    %v153 = vmul.f32 %v137, %v137
    %v154 = vmul.f32 %v138, %v138
    %v155 = vmul.f32 %v139, -50.0
    %v156 = vmul.f32 %v140, -50.0
    %v157 = vmul.f32 %v141, -50.0
    %v158 = vmul.f32 %v142, -50.0
    %v159 = vmul.f32 %v143, -50.0
    %v160 = vmul.f32 %v144, -50.0
    %v161 = vmul.f32 %v145, -50.0
    %v162 = vmul.f32 %v146, -50.0
    %v163 = vmul.f32 %v147, -50.0
    %v164 = vmul.f32 %v148, -50.0
    %v165 = vmul.f32 %v149, -50.0
    %v166 = vmul.f32 %v150, -50.0
    %v167 = vmul.f32 %v151, -50.0
    %v168 = vmul.f32 %v152, -50.0
    %v169 = vmul.f32 %v153, -50.0
    %v170 = vmul.f32 %v154, -50.0
    %v171 = vmul.f32 %v155, 1.442695
    %v172 = vpow.pop %v171
    %v173 = vmul.f32 %v156, 1.442695
    %v174 = vpow.pop %v173
    %v175 = vmul.f32 %v157, 1.442695
    %v176 = vpow.pop %v175
    %v177 = vmul.f32 %v158, 1.442695
    %v178 = vpow.pop %v177
    %v179 = vmul.f32 %v159, 1.442695
    %v180 = vpow.pop %v179
    %v181 = vmul.f32 %v160, 1.442695
    %v182 = vpow.pop %v181
    %v183 = vmul.f32 %v161, 1.442695
    %v184 = vpow.pop %v183
    %v185 = vmul.f32 %v162, 1.442695
    %v186 = vpow.pop %v185
    %v187 = vmul.f32 %v163, 1.442695
    %v188 = vpow.pop %v187
    %v189 = vmul.f32 %v164, 1.442695
    %v190 = vpow.pop %v189
    %v191 = vmul.f32 %v165, 1.442695
    %v192 = vpow.pop %v191
    %v193 = vmul.f32 %v166, 1.442695
    %v194 = vpow.pop %v193
    %v195 = vmul.f32 %v167, 1.442695
    %v196 = vpow.pop %v195
    %v197 = vmul.f32 %v168, 1.442695
    %v198 = vpow.pop %v197
    %v199 = vmul.f32 %v169, 1.442695
    %v200 = vpow.pop %v199
    %v201 = vmul.f32 %v170, 1.442695
    %v202 = vpow.pop %v201
    %v203 = vld [vmem:[#allocation2] sm:$0x3]
    %v204 = vld [vmem:[%s2] sm:$0x3]
    %205 = vmatprep.subr.mxu0 0.0
    %206 = vmatpush1.msra.mxu0 %v172
    %207 = vmatprep.subr.mxu0 0.0
    %208 = vmatpush1.msra.mxu0 %v174
    %209 = vmatprep.subr.mxu0 0.0
    %210 = vmatpush1.msra.mxu0 %v176
    %211 = vmatprep.subr.mxu0 0.0
    %212 = vmatpush1.msra.mxu0 %v178
    %213 = vmatprep.subr.mxu0 0.0
    %214 = vmatpush1.msra.mxu0 %v180
    %215 = vmatprep.subr.mxu0 0.0
    %216 = vmatpush1.msra.mxu0 %v182
    %217 = vmatprep.subr.mxu0 0.0
    %218 = vmatpush1.msra.mxu0 %v184
    %219 = vmatprep.subr.mxu0 0.0
    %220 = vmatpush1.msra.mxu0 %v186
    %221 = vmatprep.subr.mxu0 0.0
    %222 = vmatpush1.msra.mxu0 %v188
    %223 = vmatprep.subr.mxu0 0.0
    %224 = vmatpush1.msra.mxu0 %v190
    %225 = vmatprep.subr.mxu0 0.0
    %226 = vmatpush1.msra.mxu0 %v192
    %227 = vmatprep.subr.mxu0 0.0
    %228 = vmatpush1.msra.mxu0 %v194
    %229 = vmatprep.subr.mxu0 0.0
    %230 = vmatpush1.msra.mxu0 %v196
    %231 = vmatprep.subr.mxu0 0.0
    %232 = vmatpush1.msra.mxu0 %v198
    %233 = vmatprep.subr.mxu0 0.0
    %234 = vmatpush1.msra.mxu0 %v200
    %235 = vmatprep.subr.mxu0 0.0
    %236 = vmatpush1.msra.mxu0 %v202
    %237 = vmatprep.subr.mxu0 0.0
    %238 = vmatpush1.msra.mxu0 0.0
    %239 = vmatprep.subr.mxu0 0.0
    %240 = vmatpush1.msra.mxu0 0.0
    %241 = vmatprep.subr.mxu0 0.0
    %242 = vmatpush1.msra.mxu0 0.0
    %243 = vmatprep.subr.mxu0 0.0
    %244 = vmatpush1.msra.mxu0 0.0
    %245 = vmatprep.subr.mxu0 0.0
    %246 = vmatpush1.msra.mxu0 0.0
    %247 = vmatprep.subr.mxu0 0.0
    %248 = vmatpush1.msra.mxu0 0.0
    %249 = vmatprep.subr.mxu0 0.0
    %250 = vmatpush1.msra.mxu0 0.0
    %251 = vmatprep.subr.mxu0 0.0
    %252 = vmatpush1.msra.mxu0 0.0
    %253 = vmatprep.subr.mxu0 0.0
    %254 = vmatpush1.msra.mxu0 0.0
    %255 = vmatprep.subr.mxu0 0.0
    %256 = vmatpush1.msra.mxu0 0.0
    %257 = vmatprep.subr.mxu0 0.0
    %258 = vmatpush1.msra.mxu0 0.0
    %259 = vmatprep.subr.mxu0 0.0
    %260 = vmatpush1.msra.mxu0 0.0
    %261 = vmatprep.subr.mxu0 0.0
    %262 = vmatpush1.msra.mxu0 0.0
    %263 = vmatprep.subr.mxu0 0.0
    %264 = vmatpush1.msra.mxu0 0.0
    %265 = vmatprep.subr.mxu0 0.0
    %266 = vmatpush1.msra.mxu0 0.0
    %267 = vmatprep.subr.mxu0 0.0
    %268 = vmatpush1.msra.mxu0 0.0
    %269 = vmatprep.mubr.f32.mxu0 0.0
    %270 = vmatmul.mubr.f32.gmra.mrb[0].mxu0 %v204
    %v271 = vpop.f32.mrb[0].mxu0
    %v272 = vadd.f32 0.0, %v271
    %v273 = vpop.f32.mrb[0].mxu0
    %274 = vdwg.mxu0
    %v275 = vadd.f32 %v203, %v272
    %276 = vst [vmem:[#allocation2] sm:$0x3] %v275
    // Predicated region
    $region18: #{tpu_custom_call.1} parent=1 // pred_check
      %p277 = pneg %p15
    $region19: #{tpu_custom_call.1} parent=1 // pred_check_branch
      %279 = sbr.rel (%p277) target = $region21
    $region20: #{tpu_custom_call.1} parent=1 // pred_region
      %v280 = vld [vmem:[#allocation2] sm:$0x1]
      %281 = vst [vmem:[#allocation3] sm:$0x1] %v280
      %v282 = vld [vmem:[#allocation2 + $0x1] sm:$0x1]
      %v283 = vadd.f32 %v280, 1e-08
      %v284 = vrcp.pop %v283
      %v285 = vmul.f32 %v282, %v284
      %286 = vst [vmem:[#allocation3 + $0x1] sm:$0x1] %v285
    $region21: #{tpu_custom_call.1} parent=1 // pred_fallthru
      _
    // Predicated region
    $region22: #{tpu_custom_call.1} parent=1 // pred_check
      _
    $region23: #{tpu_custom_call.1} parent=1 // pred_check_branch
      %288 = sbr.rel (0) target = $region25
    $region24: #{tpu_custom_call.1} parent=1 // pred_region
      %s290 = ssub.s32 32, 32
      %291 = vsyncadd [#allocation4], %s290
      %s293 = sshll.u32 [#allocation3], 4
      %s294 = int_to_ptr.vmem [resolvable:$true] %s293
      %296 = dma.vmem_to_hbm [thread:$0]  %s294, 32, %s3, [#allocation4]
    $region25: #{tpu_custom_call.1} parent=1 // pred_fallthru
      _
    // Predicated region
    $region26: #{tpu_custom_call.1} parent=1 // pred_check
      _
    $region27: #{tpu_custom_call.1} parent=1 // pred_check_branch
      %298 = sbr.rel (0) target = $region29
    $region28: #{tpu_custom_call.1} parent=1 // pred_region
      %299 = dma.done [#allocation4], 32
    $region29: #{tpu_custom_call.1} parent=1 // pred_fallthru
      _
    %300 = vsyncpa [#allocation4], 1

</llo_original>
